<compile_context>
chip_gen: v6e
topology: v6e:2x2x1
jax: 0.10.0
libtpu: 0.0.40
codegen_flags: <defaults>
</compile_context>

<pallas_src>
import jax
import jax.numpy as jnp
from jax.experimental import pallas as pl
from jax.experimental.pallas import tpu as pltpu

LANE = 128          # TPU lane width; feature/action dims are padded to a multiple
FC1_DIMS = 256      # Policy.fc1 output width
FC2_DIMS = 128      # Policy.fc2 output width
OUT_DTYPE = jnp.bfloat16   # kernel writeback dtype (wrapper returns f32)


def _round_up(x, m):
    return -(-x // m) * m


def _device_vmem_bytes():
    """Physical VMEM capacity of the current TPU generation (fallback: v7x 64 MiB)."""
    try:
        return int(pltpu.get_tpu_info().vmem_capacity_bytes)
    except Exception:
        return 64 * 1024 * 1024


def _per_row_vmem_bytes(d_pad, a_pad):
    """Approx VMEM bytes per batch row: double-buffered x/out tiles + intermediates."""
    return (2 * d_pad * 2                      # input tile, bf16, double-buffered
            + 2 * a_pad * jnp.dtype(OUT_DTYPE).itemsize   # output tile, double-buffered
            + (FC1_DIMS + FC2_DIMS + a_pad) * 4            # f32 intermediates
            + (FC1_DIMS + FC2_DIMS) * 2)                   # bf16 re-casts feeding the MXU


def _policy_kernel(x_ref, w1_ref, b1_ref, w2_ref, b2_ref, w3_ref, b3_ref, o_ref):
    # fc1 + ReLU  (bf16 operands, f32 accumulation on the MXU; x_ref is already bf16)
    h1 = jnp.dot(x_ref[...], w1_ref[...], preferred_element_type=jnp.float32)
    h1 = jnp.maximum(h1 + b1_ref[...], 0.0)

    # fc2 + ReLU
    h2 = jnp.dot(h1.astype(jnp.bfloat16), w2_ref[...],
                 preferred_element_type=jnp.float32)
    h2 = jnp.maximum(h2 + b2_ref[...], 0.0)

    # fc3 -> logits. Padded action lanes carry a -1e30 bias (baked in at init),
    # so they contribute exp(-inf)=0 to the softmax and emit probability 0 —
    # no per-tile iota/compare/select needed here.
    logits = jnp.dot(h2.astype(jnp.bfloat16), w3_ref[...],
                     preferred_element_type=jnp.float32)
    logits = logits + b3_ref[...]

    # Fused softmax (max/sum on XLU, exp/reciprocal on EUP).
    m = jnp.max(logits, axis=-1, keepdims=True)
    e = jnp.exp(logits - m)
    denom = jnp.sum(e, axis=-1, keepdims=True)
    o_ref[...] = (e * pl.reciprocal(denom, approx=False)).astype(o_ref.dtype)


def policy_forward(x, params, *, tile_b=None):
    """x: (B, dim_states). params: dict from init_params. Returns (B, n_actions) f32 probs."""
    w1, b1 = params["w1"], params["b1"]
    w2, b2 = params["w2"], params["b2"]
    w3, b3 = params["w3"], params["b3"]
    n_actions = params["n_actions"]

    B, d_in = x.shape
    d_pad = w1.shape[0]                       # lane-padded feature width (>= 128)
    a_pad = w3.shape[1]                       # lane-padded action width  (>= 128)

    # ---- tile selection: VMEM-derived cap, >= 2 tiles for big batches (v7x 2 TCs) ----
    vmem_cap = _device_vmem_bytes()
    per_row = _per_row_vmem_bytes(d_pad, a_pad)
    budget = vmem_cap // 4                    # leave room for params + compiler scratch
    tile_cap = max(16, min(8192, (budget // per_row) // 16 * 16))
    if tile_b is None:
        if B >= 256:
            tile_b = min(tile_cap, _round_up(pl.cdiv(B, 2), 16))
        else:
            tile_b = min(tile_cap, _round_up(B, 16))
    b_pad = pl.cdiv(B, tile_b) * tile_b
    num_tiles = b_pad // tile_b

    # ---- prep input: bf16, lane-pad features, row-pad batch ----
    x = x.astype(jnp.bfloat16)
    if d_pad != d_in:
        x = jnp.pad(x, ((0, 0), (0, d_pad - d_in)))   # padded w1 rows are zero -> no effect
    if b_pad != B:
        x = jnp.pad(x, ((0, b_pad - B), (0, 0)))

    # ---- VMEM budget & cost hint ----
    param_bytes = sum(int(a.size) * a.dtype.itemsize for a in (w1, b1, w2, b2, w3, b3))
    est_bytes = 2 * param_bytes + tile_b * per_row
    vmem_limit = int(min(vmem_cap * 3 // 4, max(16 * 1024 * 1024, 2 * est_bytes)))

    out_itemsize = jnp.dtype(OUT_DTYPE).itemsize
    cost = pl.CostEstimate(
        flops=2 * b_pad * (d_pad * FC1_DIMS + FC1_DIMS * FC2_DIMS + FC2_DIMS * a_pad)
              + 5 * b_pad * a_pad,
        transcendentals=b_pad * a_pad,
        bytes_accessed=int(x.size) * 2 + param_bytes + b_pad * a_pad * out_itemsize,
    )

    act_spec = pl.BlockSpec((tile_b, d_pad), lambda i: (i, 0))
    out_spec = pl.BlockSpec((tile_b, a_pad), lambda i: (i, 0))
    # Constant index_map -> weights/biases stay resident in VMEM across batch tiles.
    pinned = lambda arr: pl.BlockSpec(arr.shape, lambda i: (0, 0))

    out = pl.pallas_call(
        _policy_kernel,
        out_shape=jax.ShapeDtypeStruct((b_pad, a_pad), OUT_DTYPE),
        grid=(num_tiles,),
        in_specs=[
            act_spec,
            pinned(w1), pinned(b1),
            pinned(w2), pinned(b2),
            pinned(w3), pinned(b3),
        ],
        out_specs=out_spec,
        compiler_params=pltpu.CompilerParams(
            dimension_semantics=("parallel",),
            vmem_limit_bytes=vmem_limit,
        ),
        cost_estimate=cost,
    )(x, w1, b1, w2, b2, w3, b3)

    # Slice off padding; return f32 probabilities (module interface).
    return out[:B, :n_actions].astype(jnp.float32)


def init_params(key, dim_states, dim_actions):
    """Mimics nn.Linear's uniform(-1/sqrt(fan_in), +) init.

    Weights are stored transposed (in, out) in bf16; biases are f32 (1, out).
    fc1's input dim is zero-padded to a lane multiple; fc3's output dim is
    lane-padded with zero weights and a -1e30 bias (softmax mask baked in).
    """
    ks = jax.random.split(key, 6)
    d_pad = max(LANE, _round_up(dim_states, LANE))
    a_pad = max(LANE, _round_up(dim_actions, LANE))

    def linear(kw, kb, fan_in, fan_out):
        bound = 1.0 / jnp.sqrt(fan_in)
        w = jax.random.uniform(kw, (fan_in, fan_out), jnp.float32, -bound, bound)
        b = jax.random.uniform(kb, (1, fan_out), jnp.float32, -bound, bound)
        return w.astype(jnp.bfloat16), b

    w1, b1 = linear(ks[0], ks[1], dim_states, FC1_DIMS)
    w2, b2 = linear(ks[2], ks[3], FC1_DIMS, FC2_DIMS)
    w3, b3 = linear(ks[4], ks[5], FC2_DIMS, dim_actions)

    # zero-pad fc1 input rows (padded x columns then contribute exactly 0)
    w1 = jnp.pad(w1, ((0, d_pad - dim_states), (0, 0)))
    # lane-pad fc3: zero weights, -1e30 bias -> padded lanes get probability 0
    w3 = jnp.pad(w3, ((0, 0), (0, a_pad - dim_actions)))
    b3 = jnp.pad(b3, ((0, 0), (0, a_pad - dim_actions)), constant_values=-1e30)

    return {"w1": w1, "b1": b1, "w2": w2, "b2": b2, "w3": w3, "b3": b3,
            "n_actions": dim_actions}


def reference_forward(x, params):
    """Pure-JAX reference mimicking the kernel's bf16-operand / f32-accumulate numerics."""
    n_actions = params["n_actions"]
    d_in = x.shape[1]
    f32 = lambda a: a.astype(jnp.float32)
    bf = lambda a: a.astype(jnp.bfloat16).astype(jnp.float32)

    w1 = f32(params["w1"])[:d_in]             # padded rows are zero; slicing is equivalent
    h1 = jnp.maximum(jnp.dot(bf(x), w1) + params["b1"], 0.0)
    h2 = jnp.maximum(jnp.dot(bf(h1), f32(params["w2"])) + params["b2"], 0.0)
    logits = (jnp.dot(bf(h2), f32(params["w3"])) + params["b3"])[:, :n_actions]
    return jax.nn.softmax(logits, axis=-1)


# TODO(synk): the optimizer (Adam), device placement, and Categorical sampling in the
# original agent are training/acting-side and are not part of this forward kernel.

if __name__ == "__main__":
    # CartPole-like dims: dim_states=4, dim_actions=2, batch=8
    dim_states, dim_actions, batch = 4, 2, 8

    key = jax.random.PRNGKey(0)
    k_params, k_state, k_big = jax.random.split(key, 3)
    params = init_params(k_params, dim_states, dim_actions)
    state = jax.random.normal(k_state, (batch, dim_states), jnp.float32)

    probs = policy_forward(state, params)
    probs = jax.block_until_ready(probs)

    ref = reference_forward(state, params)
    assert probs.shape == (batch, dim_actions)
    assert jnp.allclose(probs, ref, atol=2e-2, rtol=2e-2), (probs, ref)
    assert jnp.allclose(jnp.sum(probs, axis=-1), 1.0, atol=2e-2)

    # Exercise the multi-tile (>=2 grid steps) path used for large batches.
    big = jax.random.normal(k_big, (384, dim_states), jnp.float32)
    probs_big = jax.block_until_ready(policy_forward(big, params))
    ref_big = reference_forward(big, params)
    assert probs_big.shape == (384, dim_actions)
    assert jnp.allclose(probs_big, ref_big, atol=2e-2, rtol=2e-2)

    print("KERNEL_OK")
</pallas_src>

<mosaic_0001>
module attributes {stable_mosaic.version = 11 : i64} {
  func.func @_policy_kernel(%arg0: i32, %arg1: memref<16x128xbf16, #tpu.memory_space<vmem>>, %arg2: memref<128x256xbf16, #tpu.memory_space<vmem>>, %arg3: memref<1x256xf32, #tpu.memory_space<vmem>>, %arg4: memref<256x128xbf16, #tpu.memory_space<vmem>>, %arg5: memref<1x128xf32, #tpu.memory_space<vmem>>, %arg6: memref<128x128xbf16, #tpu.memory_space<vmem>>, %arg7: memref<1x128xf32, #tpu.memory_space<vmem>>, %arg8: memref<16x128xbf16, #tpu.memory_space<vmem>>) attributes {dimension_semantics = [#tpu.dimension_semantics<parallel>], iteration_bounds = array<i64: 1>, scalar_prefetch = 0 : i64, scratch_operands = 0 : i64, tpu.core_type = #tpu.core_type<tc>, window_params = [{transform_indices = @transform_0, window_bounds = array<i64: 16, 128>}, {pipeline_mode = #tpu.pipeline_mode<synchronous>, transform_indices = @transform_1, window_bounds = array<i64: 128, 256>}, {pipeline_mode = #tpu.pipeline_mode<synchronous>, transform_indices = @transform_2, window_bounds = array<i64: 1, 256>}, {pipeline_mode = #tpu.pipeline_mode<synchronous>, transform_indices = @transform_3, window_bounds = array<i64: 256, 128>}, {pipeline_mode = #tpu.pipeline_mode<synchronous>, transform_indices = @transform_4, window_bounds = array<i64: 1, 128>}, {pipeline_mode = #tpu.pipeline_mode<synchronous>, transform_indices = @transform_5, window_bounds = array<i64: 128, 128>}, {pipeline_mode = #tpu.pipeline_mode<synchronous>, transform_indices = @transform_6, window_bounds = array<i64: 1, 128>}, {transform_indices = @transform_7, window_bounds = array<i64: 16, 128>}]} {
    %c0 = arith.constant 0 : index
    %c0_0 = arith.constant 0 : index
    %0 = vector.load %arg1[%c0, %c0_0] : memref<16x128xbf16, #tpu.memory_space<vmem>>, vector<16x128xbf16>
    %c0_1 = arith.constant 0 : index
    %c0_2 = arith.constant 0 : index
    %1 = vector.load %arg2[%c0_1, %c0_2] : memref<128x256xbf16, #tpu.memory_space<vmem>>, vector<128x256xbf16>
    %cst = arith.constant dense<0.000000e+00> : vector<16x256xf32>
    %2 = tpu.matmul %0, %1, %cst {dimension_numbers = #tpu.dot_dimension_numbers<[1], [0], [0], [1], [0, 0, 1, 1], [], []>} : vector<16x128xbf16>, vector<128x256xbf16>, vector<16x256xf32> -> vector<16x256xf32>
    %c0_3 = arith.constant 0 : index
    %c0_4 = arith.constant 0 : index
    %3 = vector.load %arg3[%c0_3, %c0_4] : memref<1x256xf32, #tpu.memory_space<vmem>>, vector<1x256xf32>
    %4 = vector.broadcast %3 : vector<1x256xf32> to vector<16x256xf32>
    %5 = arith.addf %2, %4 : vector<16x256xf32>
    %cst_5 = arith.constant 0.000000e+00 : f32
    %6 = vector.broadcast %cst_5 : f32 to vector<16x256xf32>
    %7 = arith.maximumf %5, %6 : vector<16x256xf32>
    %8 = arith.truncf %7 : vector<16x256xf32> to vector<16x256xbf16>
    %c0_6 = arith.constant 0 : index
    %c0_7 = arith.constant 0 : index
    %9 = vector.load %arg4[%c0_6, %c0_7] : memref<256x128xbf16, #tpu.memory_space<vmem>>, vector<256x128xbf16>
    %cst_8 = arith.constant dense<0.000000e+00> : vector<16x128xf32>
    %10 = tpu.matmul %8, %9, %cst_8 {dimension_numbers = #tpu.dot_dimension_numbers<[1], [0], [0], [1], [0, 0, 1, 1], [], []>} : vector<16x256xbf16>, vector<256x128xbf16>, vector<16x128xf32> -> vector<16x128xf32>
    %c0_9 = arith.constant 0 : index
    %c0_10 = arith.constant 0 : index
    %11 = vector.load %arg5[%c0_9, %c0_10] : memref<1x128xf32, #tpu.memory_space<vmem>>, vector<1x128xf32>
    %12 = vector.broadcast %11 : vector<1x128xf32> to vector<16x128xf32>
    %13 = arith.addf %10, %12 : vector<16x128xf32>
    %cst_11 = arith.constant 0.000000e+00 : f32
    %14 = vector.broadcast %cst_11 : f32 to vector<16x128xf32>
    %15 = arith.maximumf %13, %14 : vector<16x128xf32>
    %16 = arith.truncf %15 : vector<16x128xf32> to vector<16x128xbf16>
    %c0_12 = arith.constant 0 : index
    %c0_13 = arith.constant 0 : index
    %17 = vector.load %arg6[%c0_12, %c0_13] : memref<128x128xbf16, #tpu.memory_space<vmem>>, vector<128x128xbf16>
    %cst_14 = arith.constant dense<0.000000e+00> : vector<16x128xf32>
    %18 = tpu.matmul %16, %17, %cst_14 {dimension_numbers = #tpu.dot_dimension_numbers<[1], [0], [0], [1], [0, 0, 1, 1], [], []>} : vector<16x128xbf16>, vector<128x128xbf16>, vector<16x128xf32> -> vector<16x128xf32>
    %c0_15 = arith.constant 0 : index
    %c0_16 = arith.constant 0 : index
    %19 = vector.load %arg7[%c0_15, %c0_16] : memref<1x128xf32, #tpu.memory_space<vmem>>, vector<1x128xf32>
    %20 = vector.broadcast %19 : vector<1x128xf32> to vector<16x128xf32>
    %21 = arith.addf %18, %20 : vector<16x128xf32>
    %cst_17 = arith.constant dense<0xFF800000> : vector<16xf32>
    %22 = vector.multi_reduction <maximumf>, %21, %cst_17 [1] : vector<16x128xf32> to vector<16xf32>
    %23 = vector.shape_cast %22 : vector<16xf32> to vector<16x1xf32>
    %24 = vector.broadcast %23 : vector<16x1xf32> to vector<16x128xf32>
    %25 = arith.subf %21, %24 : vector<16x128xf32>
    %26 = math.exp %25 : vector<16x128xf32>
    %cst_18 = arith.constant dense<0.000000e+00> : vector<16xf32>
    %27 = vector.multi_reduction <add>, %26, %cst_18 [1] : vector<16x128xf32> to vector<16xf32>
    %28 = vector.shape_cast %27 : vector<16xf32> to vector<16x1xf32>
    %29 = tpu.reciprocal %28 : vector<16x1xf32> -> vector<16x1xf32>
    %30 = vector.broadcast %29 : vector<16x1xf32> to vector<16x128xf32>
    %31 = arith.mulf %26, %30 : vector<16x128xf32>
    %32 = arith.truncf %31 : vector<16x128xf32> to vector<16x128xbf16>
    %c0_19 = arith.constant 0 : index
    %c0_20 = arith.constant 0 : index
    %33 = vector.load %arg8[%c0_19, %c0_20] : memref<16x128xbf16, #tpu.memory_space<vmem>>, vector<16x128xbf16>
    tpu.vector_store %arg8[%c0_19, %c0_20], %32 {strides = array<i32>} : memref<16x128xbf16, #tpu.memory_space<vmem>>, vector<16x128xbf16>,
    return
  }
  func.func @transform_0(%arg0: i32) -> (i32, i32) {
    %c0_i32 = arith.constant 0 : i32
    %c0_i32_0 = arith.constant 0 : i32
    return %arg0, %c0_i32 : i32, i32
  }
  func.func @transform_1(%arg0: i32) -> (i32, i32) {
    %c0_i32 = arith.constant 0 : i32
    %c0_i32_0 = arith.constant 0 : i32
    %c0_i32_1 = arith.constant 0 : i32
    return %c0_i32, %c0_i32_0 : i32, i32
  }
  func.func @transform_2(%arg0: i32) -> (i32, i32) {
    %c0_i32 = arith.constant 0 : i32
    %c0_i32_0 = arith.constant 0 : i32
    %c0_i32_1 = arith.constant 0 : i32
    return %c0_i32, %c0_i32_0 : i32, i32
  }
  func.func @transform_3(%arg0: i32) -> (i32, i32) {
    %c0_i32 = arith.constant 0 : i32
    %c0_i32_0 = arith.constant 0 : i32
    %c0_i32_1 = arith.constant 0 : i32
    return %c0_i32, %c0_i32_0 : i32, i32
  }
  func.func @transform_4(%arg0: i32) -> (i32, i32) {
    %c0_i32 = arith.constant 0 : i32
    %c0_i32_0 = arith.constant 0 : i32
    %c0_i32_1 = arith.constant 0 : i32
    return %c0_i32, %c0_i32_0 : i32, i32
  }
  func.func @transform_5(%arg0: i32) -> (i32, i32) {
    %c0_i32 = arith.constant 0 : i32
    %c0_i32_0 = arith.constant 0 : i32
    %c0_i32_1 = arith.constant 0 : i32
    return %c0_i32, %c0_i32_0 : i32, i32
  }
  func.func @transform_6(%arg0: i32) -> (i32, i32) {
    %c0_i32 = arith.constant 0 : i32
    %c0_i32_0 = arith.constant 0 : i32
    %c0_i32_1 = arith.constant 0 : i32
    return %c0_i32, %c0_i32_0 : i32, i32
  }
  func.func @transform_7(%arg0: i32) -> (i32, i32) {
    %c0_i32 = arith.constant 0 : i32
    %c0_i32_0 = arith.constant 0 : i32
    return %arg0, %c0_i32 : i32, i32
  }
}

</mosaic_0001>

<llo_original>
// kernel: tpu_custom_call.1
$region0: #{tpu_custom_call.1}
  #allocation0 [shape = 'u32[]', space=smem, size = 0x4, offset = 0x4, fixed_abs, tag = 'smem constant byte address 0x4 - core index']
  #allocation1 [shape = 'u32[144,128]{1,0:T(1,128)}', space=vmem, size = 0x12000, scoped, tag = 'internal scratch']
  %s0 = inlined_call_operand.hbm [shape: bf16[16,128], index: 0, kind: input, shape index: {}]
  %s1 = inlined_call_operand.hbm [shape: bf16[128,256], index: 1, kind: input, shape index: {}]
  %s2 = inlined_call_operand.vmem [shape: f32[1,256], index: 2, kind: input, shape index: {}]
  %s3 = inlined_call_operand.hbm [shape: bf16[256,128], index: 3, kind: input, shape index: {}]
  %s4 = inlined_call_operand.vmem [shape: f32[1,128], index: 4, kind: input, shape index: {}]
  %s5 = inlined_call_operand.hbm [shape: bf16[128,128], index: 5, kind: input, shape index: {}]
  %s6 = inlined_call_operand.vmem [shape: f32[1,128], index: 6, kind: input, shape index: {}]
  %s7 = inlined_call_operand.hbm [shape: bf16[16,128], index: 7, kind: output, shape index: {}]
  %s8 = sld [smem:[#allocation0]]
  $region54: #{tpu_custom_call.1} parent=0
    _
  %s10 = ssub.s32 1, %s8
  %s11 = scalar_select 0, %s10, %s8
  $region1: #{tpu_custom_call.1} parent=0
    #allocation2 [shape = 'u8[4096]{0}', space=vmem, size = 0x1000, scoped, tag = 'input window, operand 0, single buffered']
    #allocation3 [shape = 's32[1]{0}', space=sflag, size = 0x4, scoped, tag = 'scoped memory for tpu_custom_call.1']
    #allocation4 [shape = 's32[1]{0}', space=sflag, size = 0x4, scoped, tag = 'scoped memory for tpu_custom_call.1']
    #allocation5 [shape = 'u8[65536]{0}', space=vmem, size = 0x10000, scoped, tag = 'input window, operand 1, single buffered']
    #allocation6 [shape = 's32[1]{0}', space=sflag, size = 0x4, scoped, tag = 'scoped memory for tpu_custom_call.1']
    #allocation7 [shape = 'u8[65536]{0}', space=vmem, size = 0x10000, scoped, tag = 'input window, operand 3, single buffered']
    #allocation8 [shape = 'u8[32768]{0}', space=vmem, size = 0x8000, scoped, tag = 'input window, operand 5, single buffered']
    #allocation9 [shape = 's32[1]{0}', space=sflag, size = 0x4, scoped, tag = 'scoped memory for tpu_custom_call.1']
    #allocation10 [shape = 'u8[4096]{0}', space=vmem, size = 0x1000, scoped, tag = 'output window, operand 0, single buffered']
    %12 = vsyncpa [#allocation3], 0
    %13 = vsyncpa [#allocation6], 0
    %14 = vsyncpa [#allocation9], 0
    %15 = vsyncpa [#allocation4], 0
    // Predicated region
    $region2: #{tpu_custom_call.1} parent=1 // pred_check
      _
    $region3: #{tpu_custom_call.1} parent=1 // pred_check_branch
      %17 = sbr.rel (0) target = $region5
    $region4: #{tpu_custom_call.1} parent=1 // pred_region
      %s19 = ssub.s32 128, 128
      %20 = vsyncadd [#allocation3], %s19
      %s21 = sshll.u32 [#allocation2], 4
      %s22 = int_to_ptr.vmem [resolvable:$true] %s21
      %27 = dma.hbm_to_vmem [thread:$0]  %s0, 128, %s22, [#allocation3], 64, 64, 4
    $region5: #{tpu_custom_call.1} parent=1 // pred_fallthru
      _
    // Predicated region
    $region6: #{tpu_custom_call.1} parent=1 // pred_check
      _
    $region7: #{tpu_custom_call.1} parent=1 // pred_check_branch
      %29 = sbr.rel (0) target = $region9
    $region8: #{tpu_custom_call.1} parent=1 // pred_region
      %s31 = ssub.s32 2048, 2048
      %32 = vsyncadd [#allocation6], %s31
      %s33 = sshll.u32 [#allocation5], 4
      %s34 = int_to_ptr.vmem [resolvable:$true] %s33
      %39 = dma.hbm_to_vmem [thread:$0]  %s1, 2048, %s34, [#allocation6], 128, 128, 8
    $region9: #{tpu_custom_call.1} parent=1 // pred_fallthru
      _
    // Predicated region
    $region10: #{tpu_custom_call.1} parent=1 // pred_check
      _
    $region11: #{tpu_custom_call.1} parent=1 // pred_check_branch
      %41 = sbr.rel (0) target = $region13
    $region12: #{tpu_custom_call.1} parent=1 // pred_region
      _
    $region13: #{tpu_custom_call.1} parent=1 // pred_fallthru
      _
    // Predicated region
    $region14: #{tpu_custom_call.1} parent=1 // pred_check
      _
    $region15: #{tpu_custom_call.1} parent=1 // pred_check_branch
      %43 = sbr.rel (0) target = $region17
    $region16: #{tpu_custom_call.1} parent=1 // pred_region
      %s45 = ssub.s32 2048, 2048
      %46 = vsyncadd [#allocation6], %s45
      %s47 = sshll.u32 [#allocation7], 4
      %s48 = int_to_ptr.vmem [resolvable:$true] %s47
      %53 = dma.hbm_to_vmem [thread:$0]  %s3, 2048, %s48, [#allocation6], 64, 64, 4
    $region17: #{tpu_custom_call.1} parent=1 // pred_fallthru
      _
    // Predicated region
    $region18: #{tpu_custom_call.1} parent=1 // pred_check
      _
    $region19: #{tpu_custom_call.1} parent=1 // pred_check_branch
      %55 = sbr.rel (0) target = $region21
    $region20: #{tpu_custom_call.1} parent=1 // pred_region
      _
    $region21: #{tpu_custom_call.1} parent=1 // pred_fallthru
      _
    // Predicated region
    $region22: #{tpu_custom_call.1} parent=1 // pred_check
      _
    $region23: #{tpu_custom_call.1} parent=1 // pred_check_branch
      %57 = sbr.rel (0) target = $region25
    $region24: #{tpu_custom_call.1} parent=1 // pred_region
      %s59 = ssub.s32 1024, 1024
      %60 = vsyncadd [#allocation9], %s59
      %s61 = sshll.u32 [#allocation8], 4
      %s62 = int_to_ptr.vmem [resolvable:$true] %s61
      %67 = dma.hbm_to_vmem [thread:$0]  %s5, 1024, %s62, [#allocation9], 64, 64, 4
    $region25: #{tpu_custom_call.1} parent=1 // pred_fallthru
      _
    // Predicated region
    $region26: #{tpu_custom_call.1} parent=1 // pred_check
      _
    $region27: #{tpu_custom_call.1} parent=1 // pred_check_branch
      %69 = sbr.rel (0) target = $region29
    $region28: #{tpu_custom_call.1} parent=1 // pred_region
      _
    $region29: #{tpu_custom_call.1} parent=1 // pred_fallthru
      _
    // Predicated region
    $region30: #{tpu_custom_call.1} parent=1 // pred_check
      _
    $region31: #{tpu_custom_call.1} parent=1 // pred_check_branch
      %71 = sbr.rel (0) target = $region33
    $region32: #{tpu_custom_call.1} parent=1 // pred_region
      %72 = dma.done [#allocation3], 128
    $region33: #{tpu_custom_call.1} parent=1 // pred_fallthru
      _
    // Predicated region
    $region34: #{tpu_custom_call.1} parent=1 // pred_check
      _
    $region35: #{tpu_custom_call.1} parent=1 // pred_check_branch
      %74 = sbr.rel (0) target = $region37
    $region36: #{tpu_custom_call.1} parent=1 // pred_region
      %75 = dma.done [#allocation6], 2048
    $region37: #{tpu_custom_call.1} parent=1 // pred_fallthru
      _
    // Predicated region
    $region38: #{tpu_custom_call.1} parent=1 // pred_check
      _
    $region39: #{tpu_custom_call.1} parent=1 // pred_check_branch
      %77 = sbr.rel (0) target = $region41
    $region40: #{tpu_custom_call.1} parent=1 // pred_region
      %78 = dma.done [#allocation6], 2048
    $region41: #{tpu_custom_call.1} parent=1 // pred_fallthru
      _
    // Predicated region
    $region42: #{tpu_custom_call.1} parent=1 // pred_check
      _
    $region43: #{tpu_custom_call.1} parent=1 // pred_check_branch
      %80 = sbr.rel (0) target = $region45
    $region44: #{tpu_custom_call.1} parent=1 // pred_region
      %81 = dma.done [#allocation9], 1024
    $region45: #{tpu_custom_call.1} parent=1 // pred_fallthru
      _
    %v83 = vld [vmem:[#allocation2] sm:$0xf]
    %v84 = vld [vmem:[#allocation2 + $0x4] sm:$0xf]
    %v85 = vld [vmem:[#allocation5] sm:$0xff]
    %v86 = vld [vmem:[#allocation5 + $0x8] sm:$0xff]
    %v87 = vld [vmem:[#allocation5 + $0x10] sm:$0xff]
    %v88 = vld [vmem:[#allocation5 + $0x18] sm:$0xff]
    %v89 = vld [vmem:[#allocation5 + $0x20] sm:$0xff]
    %v90 = vld [vmem:[#allocation5 + $0x28] sm:$0xff]
    %v91 = vld [vmem:[#allocation5 + $0x30] sm:$0xff]
    %v92 = vld [vmem:[#allocation5 + $0x38] sm:$0xff]
    %v93 = vld [vmem:[#allocation5 + $0x40] sm:$0xff]
    %v94 = vld [vmem:[#allocation5 + $0x48] sm:$0xff]
    %v95 = vld [vmem:[#allocation5 + $0x50] sm:$0xff]
    %v96 = vld [vmem:[#allocation5 + $0x58] sm:$0xff]
    %v97 = vld [vmem:[#allocation5 + $0x60] sm:$0xff]
    %v98 = vld [vmem:[#allocation5 + $0x68] sm:$0xff]
    %v99 = vld [vmem:[#allocation5 + $0x70] sm:$0xff]
    %v100 = vld [vmem:[#allocation5 + $0x78] sm:$0xff]
    %v101 = vld [vmem:[%s2] sm:$0x3]
    %v103 = vlaneseq
    %v104 = vshrl.u32 %v103, 7
    %v105 = vsub.s32 0, %v104
    %v106 = vrot.slane %v101, %v105
    %v107 = vlaneseq
    %v108 = vshrl.u32 %v107, 7
    %v109 = vsub.s32 1, %v108
    %v110 = vrot.slane %v101, %v109
    %v115 = vunpack.c.l.b16 %v83
    %v116 = vunpack.c.l.b16 %v84
    %v117 = vpack.c.b16 %v116, %v115
    %v135 = vunpack.c.l.b16 %v85
    %v136 = vunpack.c.h.b16 %v85
    %v137 = vunpack.c.l.b16 %v86
    %v138 = vunpack.c.h.b16 %v86
    %v139 = vunpack.c.l.b16 %v87
    %v140 = vunpack.c.h.b16 %v87
    %v141 = vunpack.c.l.b16 %v88
    %v142 = vunpack.c.h.b16 %v88
    %v143 = vunpack.c.l.b16 %v89
    %v144 = vunpack.c.h.b16 %v89
    %v145 = vunpack.c.l.b16 %v90
    %v146 = vunpack.c.h.b16 %v90
    %v147 = vunpack.c.l.b16 %v91
    %v148 = vunpack.c.h.b16 %v91
    %v149 = vunpack.c.l.b16 %v92
    %v150 = vunpack.c.h.b16 %v92
    %v151 = vunpack.c.l.b16 %v93
    %v152 = vunpack.c.h.b16 %v93
    %v153 = vunpack.c.l.b16 %v94
    %v154 = vunpack.c.h.b16 %v94
    %v155 = vunpack.c.l.b16 %v95
    %v156 = vunpack.c.h.b16 %v95
    %v157 = vunpack.c.l.b16 %v96
    %v158 = vunpack.c.h.b16 %v96
    %v159 = vunpack.c.l.b16 %v97
    %v160 = vunpack.c.h.b16 %v97
    %v161 = vunpack.c.l.b16 %v98
    %v162 = vunpack.c.h.b16 %v98
    %v163 = vunpack.c.l.b16 %v99
    %v164 = vunpack.c.h.b16 %v99
    %v165 = vunpack.c.l.b16 %v100
    %v166 = vunpack.c.h.b16 %v100
    %v167 = vpack.c.b16 %v137, %v135
    %v168 = vpack.c.b16 %v138, %v136
    %v169 = vpack.c.b16 %v141, %v139
    %v170 = vpack.c.b16 %v142, %v140
    %v171 = vpack.c.b16 %v145, %v143
    %v172 = vpack.c.b16 %v146, %v144
    %v173 = vpack.c.b16 %v149, %v147
    %v174 = vpack.c.b16 %v150, %v148
    %v175 = vpack.c.b16 %v153, %v151
    %v176 = vpack.c.b16 %v154, %v152
    %v177 = vpack.c.b16 %v157, %v155
    %v178 = vpack.c.b16 %v158, %v156
    %v179 = vpack.c.b16 %v161, %v159
    %v180 = vpack.c.b16 %v162, %v160
    %v181 = vpack.c.b16 %v165, %v163
    %v182 = vpack.c.b16 %v166, %v164
    %199 = vmatprep.subr.bf16.mxu0 %v182
    %200 = vmatpush1.bf16.msra.mxu0 %v181
    %201 = vmatprep.subr.bf16.mxu0 %v180
    %202 = vmatpush1.bf16.msra.mxu0 %v179
    %203 = vmatprep.subr.bf16.mxu0 %v178
    %204 = vmatpush1.bf16.msra.mxu0 %v177
    %205 = vmatprep.subr.bf16.mxu0 %v176
    %206 = vmatpush1.bf16.msra.mxu0 %v175
    %207 = vmatprep.subr.bf16.mxu0 %v174
    %208 = vmatpush1.bf16.msra.mxu0 %v173
    %209 = vmatprep.subr.bf16.mxu0 %v172
    %210 = vmatpush1.bf16.msra.mxu0 %v171
    %211 = vmatprep.subr.bf16.mxu0 %v170
    %212 = vmatpush1.bf16.msra.mxu0 %v169
    %213 = vmatprep.subr.bf16.mxu0 %v168
    %214 = vmatpush1.bf16.msra.mxu0 %v167
    %215 = vmatprep.subr.bf16.mxu0 0
    %216 = vmatpush2.bf16.msra.mxu0 0
    %217 = vmatprep.subr.bf16.mxu0 0
    %218 = vmatpush2.bf16.msra.mxu0 0
    %219 = vmatprep.subr.bf16.mxu0 0
    %220 = vmatpush2.bf16.msra.mxu0 0
    %221 = vmatprep.subr.bf16.mxu0 0
    %222 = vmatpush2.bf16.msra.mxu0 0
    %223 = vmatprep.subr.bf16.mxu0 0
    %224 = vmatpush2.bf16.msra.mxu0 0
    %225 = vmatprep.subr.bf16.mxu0 0
    %226 = vmatpush2.bf16.msra.mxu0 0
    %227 = vmatprep.subr.bf16.mxu0 0
    %228 = vmatpush2.bf16.msra.mxu0 0
    %229 = vmatprep.subr.bf16.mxu0 0
    %230 = vmatpush2.bf16.msra.mxu0 0
    %231 = vmatprep.mubr.bf16.mxu0 0
    %232 = vmatmul.mubr.bf16.gmra.mxu0 %v117
    %v233 = vpop.f32.mrf.mxu0
    %v234 = vadd.f32 %v106, %v233
    %v235 = vpop.f32.mrf.mxu0
    %v236 = vadd.f32 %v110, %v235
    %v237 = vpop.f32.mrf.mxu0
    %v238 = vadd.f32 %v106, %v237
    %v239 = vpop.f32.mrf.mxu0
    %v240 = vadd.f32 %v110, %v239
    %241 = vdwg.mxu0
    %v242 = vmax.f32 %v234, 0.0
    %v243 = vmax.f32 %v236, 0.0
    %v244 = vmax.f32 %v238, 0.0
    %v245 = vmax.f32 %v240, 0.0
    %v246 = vpack.c.bf16 %v244, %v242
    %v247 = vpack.c.bf16 %v245, %v243
    %v248 = vld [vmem:[#allocation7] sm:$0xf]
    %v249 = vld [vmem:[#allocation7 + $0x4] sm:$0xf]
    %v250 = vld [vmem:[#allocation7 + $0x8] sm:$0xf]
    %v251 = vld [vmem:[#allocation7 + $0xc] sm:$0xf]
    %v252 = vld [vmem:[#allocation7 + $0x10] sm:$0xf]
    %v253 = vld [vmem:[#allocation7 + $0x14] sm:$0xf]
    %v254 = vld [vmem:[#allocation7 + $0x18] sm:$0xf]
    %v255 = vld [vmem:[#allocation7 + $0x1c] sm:$0xf]
    %v256 = vld [vmem:[#allocation7 + $0x20] sm:$0xf]
    %v257 = vld [vmem:[#allocation7 + $0x24] sm:$0xf]
    %v258 = vld [vmem:[#allocation7 + $0x28] sm:$0xf]
    %v259 = vld [vmem:[#allocation7 + $0x2c] sm:$0xf]
    %v260 = vld [vmem:[#allocation7 + $0x30] sm:$0xf]
    %v261 = vld [vmem:[#allocation7 + $0x34] sm:$0xf]
    %v262 = vld [vmem:[#allocation7 + $0x38] sm:$0xf]
    %v263 = vld [vmem:[#allocation7 + $0x3c] sm:$0xf]
    %v264 = vld [vmem:[#allocation7 + $0x40] sm:$0xf]
    %v265 = vld [vmem:[#allocation7 + $0x44] sm:$0xf]
    %v266 = vld [vmem:[#allocation7 + $0x48] sm:$0xf]
    %v267 = vld [vmem:[#allocation7 + $0x4c] sm:$0xf]
    %v268 = vld [vmem:[#allocation7 + $0x50] sm:$0xf]
    %v269 = vld [vmem:[#allocation7 + $0x54] sm:$0xf]
    %v270 = vld [vmem:[#allocation7 + $0x58] sm:$0xf]
    %v271 = vld [vmem:[#allocation7 + $0x5c] sm:$0xf]
    %v272 = vld [vmem:[#allocation7 + $0x60] sm:$0xf]
    %v273 = vld [vmem:[#allocation7 + $0x64] sm:$0xf]
    %v274 = vld [vmem:[#allocation7 + $0x68] sm:$0xf]
    %v275 = vld [vmem:[#allocation7 + $0x6c] sm:$0xf]
    %v276 = vld [vmem:[#allocation7 + $0x70] sm:$0xf]
    %v277 = vld [vmem:[#allocation7 + $0x74] sm:$0xf]
    %v278 = vld [vmem:[#allocation7 + $0x78] sm:$0xf]
    %v279 = vld [vmem:[#allocation7 + $0x7c] sm:$0xf]
    %v280 = vld [vmem:[%s4] sm:$0x1]
    %v282 = vlaneseq
    %v283 = vshrl.u32 %v282, 7
    %v284 = vsub.s32 0, %v283
    %v285 = vrot.slane %v280, %v284
    %v319 = vunpack.c.l.b16 %v248
    %v320 = vunpack.c.l.b16 %v249
    %v321 = vunpack.c.l.b16 %v250
    %v322 = vunpack.c.l.b16 %v251
    %v323 = vunpack.c.l.b16 %v252
    %v324 = vunpack.c.l.b16 %v253
    %v325 = vunpack.c.l.b16 %v254
    %v326 = vunpack.c.l.b16 %v255
    %v327 = vunpack.c.l.b16 %v256
    %v328 = vunpack.c.l.b16 %v257
    %v329 = vunpack.c.l.b16 %v258
    %v330 = vunpack.c.l.b16 %v259
    %v331 = vunpack.c.l.b16 %v260
    %v332 = vunpack.c.l.b16 %v261
    %v333 = vunpack.c.l.b16 %v262
    %v334 = vunpack.c.l.b16 %v263
    %v335 = vunpack.c.l.b16 %v264
    %v336 = vunpack.c.l.b16 %v265
    %v337 = vunpack.c.l.b16 %v266
    %v338 = vunpack.c.l.b16 %v267
    %v339 = vunpack.c.l.b16 %v268
    %v340 = vunpack.c.l.b16 %v269
    %v341 = vunpack.c.l.b16 %v270
    %v342 = vunpack.c.l.b16 %v271
    %v343 = vunpack.c.l.b16 %v272
    %v344 = vunpack.c.l.b16 %v273
    %v345 = vunpack.c.l.b16 %v274
    %v346 = vunpack.c.l.b16 %v275
    %v347 = vunpack.c.l.b16 %v276
    %v348 = vunpack.c.l.b16 %v277
    %v349 = vunpack.c.l.b16 %v278
    %v350 = vunpack.c.l.b16 %v279
    %v351 = vpack.c.b16 %v320, %v319
    %v352 = vpack.c.b16 %v322, %v321
    %v353 = vpack.c.b16 %v324, %v323
    %v354 = vpack.c.b16 %v326, %v325
    %v355 = vpack.c.b16 %v328, %v327
    %v356 = vpack.c.b16 %v330, %v329
    %v357 = vpack.c.b16 %v332, %v331
    %v358 = vpack.c.b16 %v334, %v333
    %v359 = vpack.c.b16 %v336, %v335
    %v360 = vpack.c.b16 %v338, %v337
    %v361 = vpack.c.b16 %v340, %v339
    %v362 = vpack.c.b16 %v342, %v341
    %v363 = vpack.c.b16 %v344, %v343
    %v364 = vpack.c.b16 %v346, %v345
    %v365 = vpack.c.b16 %v348, %v347
    %v366 = vpack.c.b16 %v350, %v349
    %383 = vmatprep.subr.bf16.mxu0 0
    %384 = vmatpush1.bf16.msra.mxu0 %v358
    %385 = vmatprep.subr.bf16.mxu0 0
    %386 = vmatpush1.bf16.msra.mxu0 %v357
    %387 = vmatprep.subr.bf16.mxu0 0
    %388 = vmatpush1.bf16.msra.mxu0 %v356
    %389 = vmatprep.subr.bf16.mxu0 0
    %390 = vmatpush1.bf16.msra.mxu0 %v355
    %391 = vmatprep.subr.bf16.mxu0 0
    %392 = vmatpush1.bf16.msra.mxu0 %v354
    %393 = vmatprep.subr.bf16.mxu0 0
    %394 = vmatpush1.bf16.msra.mxu0 %v353
    %395 = vmatprep.subr.bf16.mxu0 0
    %396 = vmatpush1.bf16.msra.mxu0 %v352
    %397 = vmatprep.subr.bf16.mxu0 0
    %398 = vmatpush1.bf16.msra.mxu0 %v351
    %399 = vmatprep.subr.bf16.mxu0 0
    %400 = vmatpush2.bf16.msra.mxu0 %v366
    %401 = vmatprep.subr.bf16.mxu0 0
    %402 = vmatpush2.bf16.msra.mxu0 %v365
    %403 = vmatprep.subr.bf16.mxu0 0
    %404 = vmatpush2.bf16.msra.mxu0 %v364
    %405 = vmatprep.subr.bf16.mxu0 0
    %406 = vmatpush2.bf16.msra.mxu0 %v363
    %407 = vmatprep.subr.bf16.mxu0 0
    %408 = vmatpush2.bf16.msra.mxu0 %v362
    %409 = vmatprep.subr.bf16.mxu0 0
    %410 = vmatpush2.bf16.msra.mxu0 %v361
    %411 = vmatprep.subr.bf16.mxu0 0
    %412 = vmatpush2.bf16.msra.mxu0 %v360
    %413 = vmatprep.subr.bf16.mxu0 0
    %414 = vmatpush2.bf16.msra.mxu0 %v359
    %415 = vmatprep.mubr.bf16.mxu0 %v247
    %416 = vmatmul.mubr.bf16.gmra.mxu0 %v246
    %v417 = vpop.f32.mrf.mxu0
    %v418 = vadd.f32 %v285, %v417
    %v419 = vpop.f32.mrf.mxu0
    %v420 = vpop.f32.mrf.mxu0
    %v421 = vadd.f32 %v285, %v420
    %v422 = vpop.f32.mrf.mxu0
    %423 = vdwg.mxu0
    %v424 = vmax.f32 %v418, 0.0
    %v425 = vmax.f32 %v421, 0.0
    %v426 = vpack.c.bf16 %v425, %v424
    %v427 = vld [vmem:[#allocation8] sm:$0xf]
    %v428 = vld [vmem:[#allocation8 + $0x4] sm:$0xf]
    %v429 = vld [vmem:[#allocation8 + $0x8] sm:$0xf]
    %v430 = vld [vmem:[#allocation8 + $0xc] sm:$0xf]
    %v431 = vld [vmem:[#allocation8 + $0x10] sm:$0xf]
    %v432 = vld [vmem:[#allocation8 + $0x14] sm:$0xf]
    %v433 = vld [vmem:[#allocation8 + $0x18] sm:$0xf]
    %v434 = vld [vmem:[#allocation8 + $0x1c] sm:$0xf]
    %v435 = vld [vmem:[#allocation8 + $0x20] sm:$0xf]
    %v436 = vld [vmem:[#allocation8 + $0x24] sm:$0xf]
    %v437 = vld [vmem:[#allocation8 + $0x28] sm:$0xf]
    %v438 = vld [vmem:[#allocation8 + $0x2c] sm:$0xf]
    %v439 = vld [vmem:[#allocation8 + $0x30] sm:$0xf]
    %v440 = vld [vmem:[#allocation8 + $0x34] sm:$0xf]
    %v441 = vld [vmem:[#allocation8 + $0x38] sm:$0xf]
    %v442 = vld [vmem:[#allocation8 + $0x3c] sm:$0xf]
    %v443 = vld [vmem:[%s6] sm:$0x1]
    %v445 = vlaneseq
    %v446 = vshrl.u32 %v445, 7
    %v447 = vsub.s32 0, %v446
    %v448 = vrot.slane %v443, %v447
    %v466 = vunpack.c.l.b16 %v427
    %v467 = vunpack.c.l.b16 %v428
    %v468 = vunpack.c.l.b16 %v429
    %v469 = vunpack.c.l.b16 %v430
    %v470 = vunpack.c.l.b16 %v431
    %v471 = vunpack.c.l.b16 %v432
    %v472 = vunpack.c.l.b16 %v433
    %v473 = vunpack.c.l.b16 %v434
    %v474 = vunpack.c.l.b16 %v435
    %v475 = vunpack.c.l.b16 %v436
    %v476 = vunpack.c.l.b16 %v437
    %v477 = vunpack.c.l.b16 %v438
    %v478 = vunpack.c.l.b16 %v439
    %v479 = vunpack.c.l.b16 %v440
    %v480 = vunpack.c.l.b16 %v441
    %v481 = vunpack.c.l.b16 %v442
    %v482 = vpack.c.b16 %v467, %v466
    %v483 = vpack.c.b16 %v469, %v468
    %v484 = vpack.c.b16 %v471, %v470
    %v485 = vpack.c.b16 %v473, %v472
    %v486 = vpack.c.b16 %v475, %v474
    %v487 = vpack.c.b16 %v477, %v476
    %v488 = vpack.c.b16 %v479, %v478
    %v489 = vpack.c.b16 %v481, %v480
    %498 = vmatprep.subr.bf16.mxu0 0
    %499 = vmatpush1.bf16.msra.mxu0 %v489
    %500 = vmatprep.subr.bf16.mxu0 0
    %501 = vmatpush1.bf16.msra.mxu0 %v488
    %502 = vmatprep.subr.bf16.mxu0 0
    %503 = vmatpush1.bf16.msra.mxu0 %v487
    %504 = vmatprep.subr.bf16.mxu0 0
    %505 = vmatpush1.bf16.msra.mxu0 %v486
    %506 = vmatprep.subr.bf16.mxu0 0
    %507 = vmatpush1.bf16.msra.mxu0 %v485
    %508 = vmatprep.subr.bf16.mxu0 0
    %509 = vmatpush1.bf16.msra.mxu0 %v484
    %510 = vmatprep.subr.bf16.mxu0 0
    %511 = vmatpush1.bf16.msra.mxu0 %v483
    %512 = vmatprep.subr.bf16.mxu0 0
    %513 = vmatpush1.bf16.msra.mxu0 %v482
    %514 = vmatprep.subr.bf16.mxu0 0
    %515 = vmatpush2.bf16.msra.mxu0 0
    %516 = vmatprep.subr.bf16.mxu0 0
    %517 = vmatpush2.bf16.msra.mxu0 0
    %518 = vmatprep.subr.bf16.mxu0 0
    %519 = vmatpush2.bf16.msra.mxu0 0
    %520 = vmatprep.subr.bf16.mxu0 0
    %521 = vmatpush2.bf16.msra.mxu0 0
    %522 = vmatprep.subr.bf16.mxu0 0
    %523 = vmatpush2.bf16.msra.mxu0 0
    %524 = vmatprep.subr.bf16.mxu0 0
    %525 = vmatpush2.bf16.msra.mxu0 0
    %526 = vmatprep.subr.bf16.mxu0 0
    %527 = vmatpush2.bf16.msra.mxu0 0
    %528 = vmatprep.subr.bf16.mxu0 0
    %529 = vmatpush2.bf16.msra.mxu0 0
    %530 = vmatprep.mubr.bf16.mxu0 0
    %531 = vmatmul.mubr.bf16.gmra.mxu0 %v426
    %v532 = vpop.f32.mrf.mxu0
    %v533 = vadd.f32 %v448, %v532
    %v534 = vpop.f32.mrf.mxu0
    %v535 = vpop.f32.mrf.mxu0
    %v536 = vadd.f32 %v448, %v535
    %v537 = vpop.f32.mrf.mxu0
    %538 = vdwg.mxu0
    %539 = vmax.xlane.f32.xlu0 %v533
    %v540 = vpop.xlane.xlu0 %539
    %541 = vmax.xlane.f32.xlu0 %v536
    %v542 = vpop.xlane.xlu0 %541
    %v543 = vsub.f32 %v533, %v540
    %v544 = vsub.f32 %v536, %v542
    %v545 = vmul.f32 %v543, 1.442695
    %v546 = vpow.pop %v545
    %v547 = vmul.f32 %v544, 1.442695
    %v548 = vpow.pop %v547
    %549 = vadd.xlane.f32.xlu0 %v546
    %v550 = vpop.xlane.xlu0 %549
    %551 = vadd.xlane.f32.xlu0 %v548
    %v552 = vpop.xlane.xlu0 %551
    %v553 = vrcp.pop %v550
    %v554 = vrcp.pop %v552
    %v555 = vmul.f32 %v546, %v553
    %v556 = vmul.f32 %v548, %v554
    %v557 = vpack.c.bf16 %v556, %v555
    %v559 = vunpack.c.l.b16 %v557
    %v560 = vunpack.c.h.b16 %v557
    %v561 = vpack.c.b16 %v559, %v559
    %v562 = vpack.c.b16 %v560, %v560
    %565 = vst [vmem:[#allocation10] sm:$0xf] %v561
    %566 = vst [vmem:[#allocation10 + $0x4] sm:$0xf] %v562
    // Predicated region
    $region46: #{tpu_custom_call.1} parent=1 // pred_check
      _
    $region47: #{tpu_custom_call.1} parent=1 // pred_check_branch
      %568 = sbr.rel (0) target = $region49
    $region48: #{tpu_custom_call.1} parent=1 // pred_region
      %s570 = ssub.s32 128, 128
      %571 = vsyncadd [#allocation4], %s570
      %s572 = sshll.u32 [#allocation10], 4
      %s573 = int_to_ptr.vmem [resolvable:$true] %s572
      %578 = dma.vmem_to_hbm [thread:$0]  %s573, 128, %s7, [#allocation4], 64, 64, 4
    $region49: #{tpu_custom_call.1} parent=1 // pred_fallthru
      _
    // Predicated region
    $region50: #{tpu_custom_call.1} parent=1 // pred_check
      _
    $region51: #{tpu_custom_call.1} parent=1 // pred_check_branch
      %580 = sbr.rel (0) target = $region53
    $region52: #{tpu_custom_call.1} parent=1 // pred_region
      %581 = dma.done [#allocation4], 128
    $region53: #{tpu_custom_call.1} parent=1 // pred_fallthru
      _
    %582 = vsyncpa [#allocation3], 1
    %583 = vsyncpa [#allocation6], 1
    %584 = vsyncpa [#allocation9], 1
    %585 = vsyncpa [#allocation4], 1

</llo_original>
